<compile_context>
chip_gen: v7x
topology: tpu7x:2x2x1
jax: 0.10.0
libtpu: 0.0.40
codegen_flags: <defaults>
</compile_context>

<pallas_src>
import functools
import math

import jax
import jax.numpy as jnp
from jax.experimental import pallas as pl
from jax.experimental.pallas import tpu as pltpu


def _s32(v):
    """Python int -> value with the same low 32 bits, as a signed int32."""
    v &= 0xFFFFFFFF
    return v - 0x100000000 if v >= 0x80000000 else v


_GOLD = _s32(0x9E3779B9)   # odd multiplicative constants (splitmix / murmur3)
_MIX1 = _s32(0x85EBCA6B)
_MIX2 = _s32(0xC2B2AE35)
_KEYM = _s32(0x27220A95)
_MANT = 0x007FFFFF         # 23-bit mantissa mask
_EXP2 = 0x40000000         # exponent bits of 2.0f


def _lsr(x, k):
    # logical shift right on int32: arithmetic shift + mask of the sign fill
    return (x >> k) & ((1 << (32 - k)) - 1)


def _fmix32(h):
    # murmur3 finalizer: strong avalanche, int32 ops only
    h = h ^ _lsr(h, 16)
    h = h * _MIX1
    h = h ^ _lsr(h, 13)
    h = h * _MIX2
    h = h ^ _lsr(h, 16)
    return h


def _cdiv(a, b):
    return (a + b - 1) // b


def _round_up(a, b):
    return _cdiv(a, b) * b


def _vned_kernel(seed_ref, x_ref, mask_ref, var_ref, o_ref, *,
                 tc, c_total, fold, feat):
    tr = x_ref.shape[0]
    i = pl.program_id(0)
    j = pl.program_id(1)

    # Unique flat element index inside the packed (rows, c_total) array.
    row = i * tr + jax.lax.broadcasted_iota(jnp.int32, (tr, tc), 0)
    col = j * tc + jax.lax.broadcasted_iota(jnp.int32, (tr, tc), 1)
    idx3 = (row * c_total + col) * 3

    # Scrambled per-call key so different seeds give unrelated streams.
    key = _fmix32(seed_ref[0] * _KEYM + _GOLD)

    def draw(off):
        h = _fmix32((idx3 + off) * _GOLD + key)
        return h & _MANT                       # 23-bit uniform integer

    m0 = draw(0)
    m1 = draw(1)
    m2 = draw(2)
    # Median of three iid uniforms ~ Epanechnikov on [-1, 1]; the mantissa ->
    # float map is monotone, so take the median on the integers directly.
    med = jnp.maximum(jnp.minimum(m0, m1),
                      jnp.minimum(jnp.maximum(m0, m1), m2))
    f = jax.lax.bitcast_convert_type(med | _EXP2, jnp.float32)   # [2, 4)
    eps = f - 3.0                                                # [-1, 1)

    if fold > 1:
        # Expand the per-original-row mask (tr, fold) to lanes (tr, tc) with a
        # tiny 0/1 expansion matmul: each original row occupies `feat` lanes.
        shift = feat.bit_length() - 1          # feat is a power of two here
        lane = jax.lax.broadcasted_iota(jnp.int32, (fold, tc), 1)
        grp = jax.lax.broadcasted_iota(jnp.int32, (fold, tc), 0)
        expand = ((lane >> shift) == grp).astype(jnp.float32)
        m = jnp.dot(mask_ref[...], expand, preferred_element_type=jnp.float32)
    else:
        m = mask_ref[...]                      # (tr, 1) broadcasts over lanes

    noise = var_ref[...] * (eps * m)           # (1, tc) * (tr, tc)
    o_ref[...] = (x_ref[...].astype(jnp.float32) + noise).astype(o_ref.dtype)


def variational_epanechnikov_dropout(x, log_sigma, mask=None, seed=0,
                                     target_block_bytes=1 << 20):
    """Eval-mode forward of VariationalNormalEpanechnikovDropout."""
    orig_shape = x.shape
    orig_dtype = x.dtype
    feat = int(orig_shape[-1])
    n_rows = int(x.size) // feat

    variance = jnp.exp(log_sigma.astype(jnp.float32)).reshape(1, feat)
    if mask is None:
        mrow = jnp.ones((n_rows,), jnp.float32)
    else:
        mrow = mask.reshape(n_rows).astype(jnp.float32)

    if feat < 128 and 128 % feat == 0:
        # Fold 128/feat consecutive rows into one 128-lane row so stores are
        # lane dense even for small feature sizes (module default H = 32).
        fold = 128 // feat
        c_total = 128
        rows = _cdiv(n_rows, fold)
        flat = x.reshape(-1)
        pad = rows * 128 - n_rows * feat
        if pad:
            flat = jnp.pad(flat, (0, pad))
        xp = flat.reshape(rows, 128)
        varp = jnp.tile(variance, (1, fold))
        if rows * fold != n_rows:
            mrow = jnp.pad(mrow, (0, rows * fold - n_rows))
        mp = mrow.reshape(rows, fold)
    else:
        # Natural (rows, feat) layout; pad the feature dim up to a multiple
        # of 128 if necessary so stores stay lane dense.
        fold = 1
        c_total = _round_up(feat, 128)
        rows = n_rows
        xp = x.reshape(n_rows, feat)
        varp = variance
        if c_total != feat:
            # TODO(synk): feature sizes that neither divide nor are divided by
            # 128 pay a pad/slice copy plus extra HBM traffic here.
            xp = jnp.pad(xp, ((0, 0), (0, c_total - feat)))
            varp = jnp.pad(varp, ((0, 0), (0, c_total - feat)))
        mp = mrow.reshape(rows, 1)

    # Column tile: largest power-of-two multiple of 128 dividing c_total.
    tc = 128
    for cand in (2048, 1024, 512, 256, 128):
        if c_total % cand == 0:
            tc = cand
            break

    # Row tile: ~target_block_bytes per x block, multiple of 8, but no bigger
    # than the (padded) problem needs.
    itemsize = jnp.dtype(orig_dtype).itemsize
    tr = max(8, (target_block_bytes // (tc * itemsize)) // 8 * 8)
    tr = min(tr, _round_up(rows, 8))
    rows_p = _round_up(rows, tr)
    if rows_p != rows:
        xp = jnp.pad(xp, ((0, rows_p - rows), (0, 0)))
        mp = jnp.pad(mp, ((0, rows_p - rows), (0, 0)))

    seed_arr = jnp.asarray([seed], dtype=jnp.int32)
    grid = (rows_p // tr, c_total // tc)

    kernel = functools.partial(_vned_kernel, tc=tc, c_total=c_total,
                               fold=fold, feat=feat)

    out = pl.pallas_call(
        kernel,
        out_shape=jax.ShapeDtypeStruct((rows_p, c_total), orig_dtype),
        grid_spec=pltpu.PrefetchScalarGridSpec(
            num_scalar_prefetch=1,
            grid=grid,
            in_specs=[
                pl.BlockSpec((tr, tc), lambda i, j, s: (i, j)),     # x
                pl.BlockSpec((tr, fold), lambda i, j, s: (i, 0)),   # mask
                pl.BlockSpec((1, tc), lambda i, j, s: (0, j)),      # variance
            ],
            out_specs=pl.BlockSpec((tr, tc), lambda i, j, s: (i, j)),
        ),
        compiler_params=pltpu.CompilerParams(
            dimension_semantics=("parallel", "parallel")),
    )(seed_arr, xp, mp, varp)

    if fold > 1:
        out = out.reshape(-1)[: n_rows * feat]
    else:
        out = out[:n_rows, :feat]
    return out.reshape(orig_shape)


if __name__ == "__main__":
    # Module config: input_size = 32, log_sigma initialized to -10.0
    B, S, H = 2, 8, 32
    key = jax.random.PRNGKey(0)
    kx, km = jax.random.split(key)

    x = jax.random.normal(kx, (B, S, H), dtype=jnp.float32)
    mask = (jax.random.uniform(km, (B, S)) > 0.2).astype(jnp.float32)
    log_sigma = jnp.full((H,), -10.0, dtype=jnp.float32)  # nn.Parameter init

    out = variational_epanechnikov_dropout(x, log_sigma, mask=mask, seed=0)
    out = jax.block_until_ready(out)

    assert out.shape == x.shape and out.dtype == x.dtype
    assert bool(jnp.all(jnp.isfinite(out)))
    # Noise magnitude is bounded by exp(-10) (Epanechnikov support is [-1, 1]).
    max_dev = float(jnp.max(jnp.abs(out - x)))
    assert max_dev <= math.exp(-10.0) + 1e-6, max_dev
    # Masked-out rows pass through unchanged.
    row_dev = jnp.max(jnp.abs(out - x), axis=-1)
    assert bool(jnp.all(jnp.where(mask == 0.0, row_dev == 0.0, True)))

    # dtype-preserving path (bf16 input, no mask).
    xb = x.astype(jnp.bfloat16)
    outb = jax.block_until_ready(
        variational_epanechnikov_dropout(xb, log_sigma, seed=1))
    assert outb.shape == xb.shape and outb.dtype == jnp.bfloat16
    assert bool(jnp.all(jnp.isfinite(outb.astype(jnp.float32))))

    print("KERNEL_OK")
</pallas_src>

<mosaic_0001>
module attributes {stable_mosaic.version = 11 : i64} {
  func.func @_vned_kernel(%arg0: i32, %arg1: i32, %arg2: memref<1xi32, #tpu.memory_space<smem>>, %arg3: memref<8x128xf32, #tpu.memory_space<vmem>>, %arg4: memref<8x4xf32, #tpu.memory_space<vmem>>, %arg5: memref<1x128xf32, #tpu.memory_space<vmem>>, %arg6: memref<8x128xf32, #tpu.memory_space<vmem>>) attributes {dimension_semantics = [#tpu.dimension_semantics<parallel>, #tpu.dimension_semantics<parallel>], iteration_bounds = array<i64: 1, 1>, scalar_prefetch = 1 : i64, scratch_operands = 0 : i64, tpu.core_type = #tpu.core_type<tc>, window_params = [{transform_indices = @transform_0, window_bounds = array<i64: 8, 128>}, {transform_indices = @transform_1, window_bounds = array<i64: 8, 4>}, {transform_indices = @transform_2, window_bounds = array<i64: 1, 128>}, {transform_indices = @transform_3, window_bounds = array<i64: 8, 128>}]} {
    %c8_i32 = arith.constant 8 : i32
    %0 = arith.muli %arg0, %c8_i32 : i32
    %1 = tpu.iota {dimensions = array<i32: 0>} : vector<8x128xi32>
    %2 = vector.broadcast %0 : i32 to vector<8x128xi32>
    %3 = arith.addi %2, %1 : vector<8x128xi32>
    %c128_i32 = arith.constant 128 : i32
    %4 = arith.muli %arg1, %c128_i32 : i32
    %5 = tpu.iota {dimensions = array<i32: 1>} : vector<8x128xi32>
    %6 = vector.broadcast %4 : i32 to vector<8x128xi32>
    %7 = arith.addi %6, %5 : vector<8x128xi32>
    %c128_i32_0 = arith.constant 128 : i32
    %8 = vector.broadcast %c128_i32_0 : i32 to vector<8x128xi32>
    %9 = arith.muli %3, %8 : vector<8x128xi32>
    %10 = arith.addi %9, %7 : vector<8x128xi32>
    %c3_i32 = arith.constant 3 : i32
    %11 = vector.broadcast %c3_i32 : i32 to vector<8x128xi32>
    %12 = arith.muli %10, %11 : vector<8x128xi32>
    %c0 = arith.constant 0 : index
    %13 = memref.load %arg2[%c0] : memref<1xi32, #tpu.memory_space<smem>>
    %c656542357_i32 = arith.constant 656542357 : i32
    %14 = arith.muli %13, %c656542357_i32 : i32
    %c-1640531527_i32 = arith.constant -1640531527 : i32
    %15 = arith.addi %14, %c-1640531527_i32 : i32
    %c16_i32 = arith.constant 16 : i32
    %16 = arith.shrsi %15, %c16_i32 : i32
    %c65535_i32 = arith.constant 65535 : i32
    %17 = arith.andi %16, %c65535_i32 : i32
    %18 = arith.xori %15, %17 : i32
    %c-2048144789_i32 = arith.constant -2048144789 : i32
    %19 = arith.muli %18, %c-2048144789_i32 : i32
    %c13_i32 = arith.constant 13 : i32
    %20 = arith.shrsi %19, %c13_i32 : i32
    %c524287_i32 = arith.constant 524287 : i32
    %21 = arith.andi %20, %c524287_i32 : i32
    %22 = arith.xori %19, %21 : i32
    %c-1028477387_i32 = arith.constant -1028477387 : i32
    %23 = arith.muli %22, %c-1028477387_i32 : i32
    %c16_i32_1 = arith.constant 16 : i32
    %24 = arith.shrsi %23, %c16_i32_1 : i32
    %c65535_i32_2 = arith.constant 65535 : i32
    %25 = arith.andi %24, %c65535_i32_2 : i32
    %26 = arith.xori %23, %25 : i32
    %c0_i32 = arith.constant 0 : i32
    %27 = vector.broadcast %c0_i32 : i32 to vector<8x128xi32>
    %28 = arith.addi %12, %27 : vector<8x128xi32>
    %c-1640531527_i32_3 = arith.constant -1640531527 : i32
    %29 = vector.broadcast %c-1640531527_i32_3 : i32 to vector<8x128xi32>
    %30 = arith.muli %28, %29 : vector<8x128xi32>
    %31 = vector.broadcast %26 : i32 to vector<8x128xi32>
    %32 = arith.addi %30, %31 : vector<8x128xi32>
    %c16_i32_4 = arith.constant 16 : i32
    %33 = vector.broadcast %c16_i32_4 : i32 to vector<8x128xi32>
    %34 = arith.shrsi %32, %33 : vector<8x128xi32>
    %c65535_i32_5 = arith.constant 65535 : i32
    %35 = vector.broadcast %c65535_i32_5 : i32 to vector<8x128xi32>
    %36 = arith.andi %34, %35 : vector<8x128xi32>
    %37 = arith.xori %32, %36 : vector<8x128xi32>
    %c-2048144789_i32_6 = arith.constant -2048144789 : i32
    %38 = vector.broadcast %c-2048144789_i32_6 : i32 to vector<8x128xi32>
    %39 = arith.muli %37, %38 : vector<8x128xi32>
    %c13_i32_7 = arith.constant 13 : i32
    %40 = vector.broadcast %c13_i32_7 : i32 to vector<8x128xi32>
    %41 = arith.shrsi %39, %40 : vector<8x128xi32>
    %c524287_i32_8 = arith.constant 524287 : i32
    %42 = vector.broadcast %c524287_i32_8 : i32 to vector<8x128xi32>
    %43 = arith.andi %41, %42 : vector<8x128xi32>
    %44 = arith.xori %39, %43 : vector<8x128xi32>
    %c-1028477387_i32_9 = arith.constant -1028477387 : i32
    %45 = vector.broadcast %c-1028477387_i32_9 : i32 to vector<8x128xi32>
    %46 = arith.muli %44, %45 : vector<8x128xi32>
    %c16_i32_10 = arith.constant 16 : i32
    %47 = vector.broadcast %c16_i32_10 : i32 to vector<8x128xi32>
    %48 = arith.shrsi %46, %47 : vector<8x128xi32>
    %c65535_i32_11 = arith.constant 65535 : i32
    %49 = vector.broadcast %c65535_i32_11 : i32 to vector<8x128xi32>
    %50 = arith.andi %48, %49 : vector<8x128xi32>
    %51 = arith.xori %46, %50 : vector<8x128xi32>
    %c8388607_i32 = arith.constant 8388607 : i32
    %52 = vector.broadcast %c8388607_i32 : i32 to vector<8x128xi32>
    %53 = arith.andi %51, %52 : vector<8x128xi32>
    %c1_i32 = arith.constant 1 : i32
    %54 = vector.broadcast %c1_i32 : i32 to vector<8x128xi32>
    %55 = arith.addi %12, %54 : vector<8x128xi32>
    %c-1640531527_i32_12 = arith.constant -1640531527 : i32
    %56 = vector.broadcast %c-1640531527_i32_12 : i32 to vector<8x128xi32>
    %57 = arith.muli %55, %56 : vector<8x128xi32>
    %58 = vector.broadcast %26 : i32 to vector<8x128xi32>
    %59 = arith.addi %57, %58 : vector<8x128xi32>
    %c16_i32_13 = arith.constant 16 : i32
    %60 = vector.broadcast %c16_i32_13 : i32 to vector<8x128xi32>
    %61 = arith.shrsi %59, %60 : vector<8x128xi32>
    %c65535_i32_14 = arith.constant 65535 : i32
    %62 = vector.broadcast %c65535_i32_14 : i32 to vector<8x128xi32>
    %63 = arith.andi %61, %62 : vector<8x128xi32>
    %64 = arith.xori %59, %63 : vector<8x128xi32>
    %c-2048144789_i32_15 = arith.constant -2048144789 : i32
    %65 = vector.broadcast %c-2048144789_i32_15 : i32 to vector<8x128xi32>
    %66 = arith.muli %64, %65 : vector<8x128xi32>
    %c13_i32_16 = arith.constant 13 : i32
    %67 = vector.broadcast %c13_i32_16 : i32 to vector<8x128xi32>
    %68 = arith.shrsi %66, %67 : vector<8x128xi32>
    %c524287_i32_17 = arith.constant 524287 : i32
    %69 = vector.broadcast %c524287_i32_17 : i32 to vector<8x128xi32>
    %70 = arith.andi %68, %69 : vector<8x128xi32>
    %71 = arith.xori %66, %70 : vector<8x128xi32>
    %c-1028477387_i32_18 = arith.constant -1028477387 : i32
    %72 = vector.broadcast %c-1028477387_i32_18 : i32 to vector<8x128xi32>
    %73 = arith.muli %71, %72 : vector<8x128xi32>
    %c16_i32_19 = arith.constant 16 : i32
    %74 = vector.broadcast %c16_i32_19 : i32 to vector<8x128xi32>
    %75 = arith.shrsi %73, %74 : vector<8x128xi32>
    %c65535_i32_20 = arith.constant 65535 : i32
    %76 = vector.broadcast %c65535_i32_20 : i32 to vector<8x128xi32>
    %77 = arith.andi %75, %76 : vector<8x128xi32>
    %78 = arith.xori %73, %77 : vector<8x128xi32>
    %c8388607_i32_21 = arith.constant 8388607 : i32
    %79 = vector.broadcast %c8388607_i32_21 : i32 to vector<8x128xi32>
    %80 = arith.andi %78, %79 : vector<8x128xi32>
    %c2_i32 = arith.constant 2 : i32
    %81 = vector.broadcast %c2_i32 : i32 to vector<8x128xi32>
    %82 = arith.addi %12, %81 : vector<8x128xi32>
    %c-1640531527_i32_22 = arith.constant -1640531527 : i32
    %83 = vector.broadcast %c-1640531527_i32_22 : i32 to vector<8x128xi32>
    %84 = arith.muli %82, %83 : vector<8x128xi32>
    %85 = vector.broadcast %26 : i32 to vector<8x128xi32>
    %86 = arith.addi %84, %85 : vector<8x128xi32>
    %c16_i32_23 = arith.constant 16 : i32
    %87 = vector.broadcast %c16_i32_23 : i32 to vector<8x128xi32>
    %88 = arith.shrsi %86, %87 : vector<8x128xi32>
    %c65535_i32_24 = arith.constant 65535 : i32
    %89 = vector.broadcast %c65535_i32_24 : i32 to vector<8x128xi32>
    %90 = arith.andi %88, %89 : vector<8x128xi32>
    %91 = arith.xori %86, %90 : vector<8x128xi32>
    %c-2048144789_i32_25 = arith.constant -2048144789 : i32
    %92 = vector.broadcast %c-2048144789_i32_25 : i32 to vector<8x128xi32>
    %93 = arith.muli %91, %92 : vector<8x128xi32>
    %c13_i32_26 = arith.constant 13 : i32
    %94 = vector.broadcast %c13_i32_26 : i32 to vector<8x128xi32>
    %95 = arith.shrsi %93, %94 : vector<8x128xi32>
    %c524287_i32_27 = arith.constant 524287 : i32
    %96 = vector.broadcast %c524287_i32_27 : i32 to vector<8x128xi32>
    %97 = arith.andi %95, %96 : vector<8x128xi32>
    %98 = arith.xori %93, %97 : vector<8x128xi32>
    %c-1028477387_i32_28 = arith.constant -1028477387 : i32
    %99 = vector.broadcast %c-1028477387_i32_28 : i32 to vector<8x128xi32>
    %100 = arith.muli %98, %99 : vector<8x128xi32>
    %c16_i32_29 = arith.constant 16 : i32
    %101 = vector.broadcast %c16_i32_29 : i32 to vector<8x128xi32>
    %102 = arith.shrsi %100, %101 : vector<8x128xi32>
    %c65535_i32_30 = arith.constant 65535 : i32
    %103 = vector.broadcast %c65535_i32_30 : i32 to vector<8x128xi32>
    %104 = arith.andi %102, %103 : vector<8x128xi32>
    %105 = arith.xori %100, %104 : vector<8x128xi32>
    %c8388607_i32_31 = arith.constant 8388607 : i32
    %106 = vector.broadcast %c8388607_i32_31 : i32 to vector<8x128xi32>
    %107 = arith.andi %105, %106 : vector<8x128xi32>
    %108 = arith.minsi %53, %80 : vector<8x128xi32>
    %109 = arith.maxsi %53, %80 : vector<8x128xi32>
    %110 = arith.minsi %109, %107 : vector<8x128xi32>
    %111 = arith.maxsi %108, %110 : vector<8x128xi32>
    %c1073741824_i32 = arith.constant 1073741824 : i32
    %112 = vector.broadcast %c1073741824_i32 : i32 to vector<8x128xi32>
    %113 = arith.ori %111, %112 : vector<8x128xi32>
    %114 = tpu.bitcast %113 : vector<8x128xi32> -> vector<8x128xf32>
    %cst = arith.constant 3.000000e+00 : f32
    %115 = vector.broadcast %cst : f32 to vector<8x128xf32>
    %116 = arith.subf %114, %115 : vector<8x128xf32>
    %117 = tpu.iota {dimensions = array<i32: 1>} : vector<4x128xi32>
    %118 = tpu.iota {dimensions = array<i32: 0>} : vector<4x128xi32>
    %c5_i32 = arith.constant 5 : i32
    %119 = vector.broadcast %c5_i32 : i32 to vector<4x128xi32>
    %120 = arith.shrsi %117, %119 : vector<4x128xi32>
    %121 = arith.cmpi eq, %120, %118 : vector<4x128xi32>
    %122 = arith.extui %121 : vector<4x128xi1> to vector<4x128xi32>
    %123 = arith.sitofp %122 : vector<4x128xi32> to vector<4x128xf32>
    %c0_32 = arith.constant 0 : index
    %c0_33 = arith.constant 0 : index
    %124 = vector.load %arg4[%c0_32, %c0_33] : memref<8x4xf32, #tpu.memory_space<vmem>>, vector<8x4xf32>
    %cst_34 = arith.constant dense<0.000000e+00> : vector<8x128xf32>
    %125 = tpu.matmul %124, %123, %cst_34 {dimension_numbers = #tpu.dot_dimension_numbers<[1], [0], [0], [1], [0, 0, 1, 1], [], []>} : vector<8x4xf32>, vector<4x128xf32>, vector<8x128xf32> -> vector<8x128xf32>
    %c0_35 = arith.constant 0 : index
    %c0_36 = arith.constant 0 : index
    %126 = vector.load %arg5[%c0_35, %c0_36] : memref<1x128xf32, #tpu.memory_space<vmem>>, vector<1x128xf32>
    %127 = arith.mulf %116, %125 : vector<8x128xf32>
    %128 = vector.broadcast %126 : vector<1x128xf32> to vector<8x128xf32>
    %129 = arith.mulf %128, %127 : vector<8x128xf32>
    %c0_37 = arith.constant 0 : index
    %c0_38 = arith.constant 0 : index
    %130 = vector.load %arg3[%c0_37, %c0_38] : memref<8x128xf32, #tpu.memory_space<vmem>>, vector<8x128xf32>
    %131 = arith.addf %130, %129 : vector<8x128xf32>
    %c0_39 = arith.constant 0 : index
    %c0_40 = arith.constant 0 : index
    %132 = vector.load %arg6[%c0_39, %c0_40] : memref<8x128xf32, #tpu.memory_space<vmem>>, vector<8x128xf32>
    tpu.vector_store %arg6[%c0_39, %c0_40], %131 {strides = array<i32>} : memref<8x128xf32, #tpu.memory_space<vmem>>, vector<8x128xf32>,
    return
  }
  func.func @transform_0(%arg0: i32, %arg1: i32, %arg2: memref<1xi32, #tpu.memory_space<smem>>) -> (i32, i32) {
    %c0_i32 = arith.constant 0 : i32
    return %arg0, %arg1 : i32, i32
  }
  func.func @transform_1(%arg0: i32, %arg1: i32, %arg2: memref<1xi32, #tpu.memory_space<smem>>) -> (i32, i32) {
    %c0_i32 = arith.constant 0 : i32
    %c0_i32_0 = arith.constant 0 : i32
    return %arg0, %c0_i32 : i32, i32
  }
  func.func @transform_2(%arg0: i32, %arg1: i32, %arg2: memref<1xi32, #tpu.memory_space<smem>>) -> (i32, i32) {
    %c0_i32 = arith.constant 0 : i32
    %c0_i32_0 = arith.constant 0 : i32
    return %c0_i32, %arg1 : i32, i32
  }
  func.func @transform_3(%arg0: i32, %arg1: i32, %arg2: memref<1xi32, #tpu.memory_space<smem>>) -> (i32, i32) {
    %c0_i32 = arith.constant 0 : i32
    return %arg0, %arg1 : i32, i32
  }
}

</mosaic_0001>

<llo_original>
// kernel: tpu_custom_call.1
$region0: #{tpu_custom_call.1}
  #allocation0 [shape = 'u32[]', space=smem, size = 0x4, offset = 0x4, fixed_abs, tag = 'smem constant byte address 0x4 - core index']
  #allocation1 [shape = 'u32[144,128]{1,0:T(1,128)}', space=vmem, size = 0x12000, scoped, tag = 'internal scratch']
  #allocation2 [shape = 's32[1]{0}', space=sflag, size = 0x4, scoped, tag = 'scoped memory for tpu_custom_call.1']
  #allocation3 [shape = 's32[1]{0:T(128)S(6)}', space=smem, size = 0x200, scoped, tag = 'prefetched SMEM operand 0']
  %s0 = inlined_call_operand.<no memory space> [shape: s32[1], index: 0, kind: input, shape index: {}]
  %s1 = inlined_call_operand.vmem [shape: f32[8,128], index: 1, kind: input, shape index: {}]
  %s2 = inlined_call_operand.vmem [shape: f32[8,4], index: 2, kind: input, shape index: {}]
  %s3 = inlined_call_operand.vmem [shape: f32[1,128], index: 3, kind: input, shape index: {}]
  %s4 = inlined_call_operand.hbm [shape: f32[8,128], index: 4, kind: output, shape index: {}]
  %s5 = sld [smem:[#allocation0]]
  $region22: #{tpu_custom_call.1} parent=0
    _
  %s7 = ssub.s32 1, %s5
  %s8 = scalar_select 0, %s7, %s5
  %9 = sst [smem:[#allocation3]] %s0
  $region1: #{tpu_custom_call.1} parent=0
    #allocation4 [shape = 'u8[4096]{0}', space=vmem, size = 0x1000, scoped, tag = 'output window, operand 0, single buffered']
    #allocation5 [shape = 's32[1]{0}', space=sflag, size = 0x4, scoped, tag = 'scoped memory for tpu_custom_call.1']
    %10 = vsyncpa [#allocation5], 0
    // Predicated region
    $region2: #{tpu_custom_call.1} parent=1 // pred_check
      _
    $region3: #{tpu_custom_call.1} parent=1 // pred_check_branch
      %12 = sbr.rel (0) target = $region5
    $region4: #{tpu_custom_call.1} parent=1 // pred_region
      _
    $region5: #{tpu_custom_call.1} parent=1 // pred_fallthru
      _
    // Predicated region
    $region6: #{tpu_custom_call.1} parent=1 // pred_check
      _
    $region7: #{tpu_custom_call.1} parent=1 // pred_check_branch
      %14 = sbr.rel (0) target = $region9
    $region8: #{tpu_custom_call.1} parent=1 // pred_region
      _
    $region9: #{tpu_custom_call.1} parent=1 // pred_fallthru
      _
    // Predicated region
    $region10: #{tpu_custom_call.1} parent=1 // pred_check
      _
    $region11: #{tpu_custom_call.1} parent=1 // pred_check_branch
      %16 = sbr.rel (0) target = $region13
    $region12: #{tpu_custom_call.1} parent=1 // pred_region
      _
    $region13: #{tpu_custom_call.1} parent=1 // pred_fallthru
      _
    %s17 = smul.u32 0, 8
    %v18 = vlaneseq
    %v19 = vshrl.u32 %v18, 7
    %v20 = vstv %s17
    %v21 = vadd.s32 %v20, %v19
    %s22 = smul.u32 0, 128
    %v23 = vlaneseq
    %v24 = vand.u32 %v23, 127
    %v25 = vstv %s22
    %v26 = vadd.s32 %v25, %v24
    %v27 = vmul.u32 %v21, 128
    %v28 = vadd.s32 %v27, %v26
    %v29 = vmul.u32 %v28, 3
    %s30 = sld [smem:[#allocation3]]
    %s31 = smul.u32 %s30, 656542357
    %s32 = sadd.s32 %s31, 2654435769
    %s33 = sshra.s32 %s32, 16
    %s34 = sand.u32 %s33, 65535
    %s35 = sxor.u32 %s32, %s34
    %s36 = smul.u32 %s35, 2246822507
    %s37 = sshra.s32 %s36, 13
    %s38 = sand.u32 %s37, 524287
    %s39 = sxor.u32 %s36, %s38
    %s40 = smul.u32 %s39, 3266489909
    %s41 = sshra.s32 %s40, 16
    %s42 = sand.u32 %s41, 65535
    %s43 = sxor.u32 %s40, %s42
    %v44 = vmul.u32 %v29, 2654435769
    %v45 = vstv %s43
    %v46 = vadd.s32 %v44, %v45
    %v47 = vshra.s32 %v46, 16
    %v48 = vand.u32 %v47, 65535
    %v49 = vxor.u32 %v46, %v48
    %v50 = vmul.u32 %v49, 2246822507
    %v51 = vshra.s32 %v50, 13
    %v52 = vand.u32 %v51, 524287
    %v53 = vxor.u32 %v50, %v52
    %v54 = vmul.u32 %v53, 3266489909
    %v55 = vshra.s32 %v54, 16
    %v56 = vand.u32 %v55, 65535
    %v57 = vxor.u32 %v54, %v56
    %v58 = vand.u32 %v57, 8388607
    %v59 = vadd.s32 %v29, 1
    %v60 = vmul.u32 %v59, 2654435769
    %v61 = vadd.s32 %v60, %v45
    %v62 = vshra.s32 %v61, 16
    %v63 = vand.u32 %v62, 65535
    %v64 = vxor.u32 %v61, %v63
    %v65 = vmul.u32 %v64, 2246822507
    %v66 = vshra.s32 %v65, 13
    %v67 = vand.u32 %v66, 524287
    %v68 = vxor.u32 %v65, %v67
    %v69 = vmul.u32 %v68, 3266489909
    %v70 = vshra.s32 %v69, 16
    %v71 = vand.u32 %v70, 65535
    %v72 = vxor.u32 %v69, %v71
    %v73 = vand.u32 %v72, 8388607
    %v74 = vadd.s32 %v29, 2
    %v75 = vmul.u32 %v74, 2654435769
    %v76 = vadd.s32 %v75, %v45
    %v77 = vshra.s32 %v76, 16
    %v78 = vand.u32 %v77, 65535
    %v79 = vxor.u32 %v76, %v78
    %v80 = vmul.u32 %v79, 2246822507
    %v81 = vshra.s32 %v80, 13
    %v82 = vand.u32 %v81, 524287
    %v83 = vxor.u32 %v80, %v82
    %v84 = vmul.u32 %v83, 3266489909
    %v85 = vshra.s32 %v84, 16
    %v86 = vand.u32 %v85, 65535
    %v87 = vxor.u32 %v84, %v86
    %v88 = vand.u32 %v87, 8388607
    %vm89 = vcmp.lt.s32.totalorder %v58, %v73
    %v90 = vsel %vm89, %v58, %v73
    %vm91 = vcmp.gt.s32.totalorder %v58, %v73
    %v92 = vsel %vm91, %v58, %v73
    %vm93 = vcmp.lt.s32.totalorder %v92, %v88
    %v94 = vsel %vm93, %v92, %v88
    %vm95 = vcmp.gt.s32.totalorder %v90, %v94
    %v96 = vsel %vm95, %v90, %v94
    %v97 = vor.u32 %v96, 1073741824
    %v99 = vsub.f32 %v97, 3.0
    %v100 = vshra.s32 %v24, 5
    %vm101 = vcmp.eq.s32.totalorder %v100, %v19
    %v102 = vsel %vm101, 1, 0
    %v103 = vcvt.s32.f32 %v102
    %v104 = vld [vmem:[%s2] sm:$0xff]
    %vm105 = vcmask 31744
    %v107 = vsel %vm105, %v104, 0
    %vm109 = vcmask 1043456
    %v111 = vsel %vm109, %v103, 0
    %113 = vmatprep.subr.mxu0 0.0
    %114 = vmatpush1.msra.mxu0 %v111
    %115 = vmatprep.subr.mxu0 0.0
    %116 = vmatpush1.msra.mxu0 0.0
    %117 = vmatprep.subr.mxu0 0.0
    %118 = vmatpush1.msra.mxu0 0.0
    %119 = vmatprep.subr.mxu0 0.0
    %120 = vmatpush1.msra.mxu0 0.0
    %121 = vmatprep.subr.mxu0 0.0
    %122 = vmatpush1.msra.mxu0 0.0
    %123 = vmatprep.subr.mxu0 0.0
    %124 = vmatpush1.msra.mxu0 0.0
    %125 = vmatprep.subr.mxu0 0.0
    %126 = vmatpush1.msra.mxu0 0.0
    %127 = vmatprep.subr.mxu0 0.0
    %128 = vmatpush1.msra.mxu0 0.0
    %129 = vmatprep.subr.mxu0 0.0
    %130 = vmatpush1.msra.mxu0 0.0
    %131 = vmatprep.subr.mxu0 0.0
    %132 = vmatpush1.msra.mxu0 0.0
    %133 = vmatprep.subr.mxu0 0.0
    %134 = vmatpush1.msra.mxu0 0.0
    %135 = vmatprep.subr.mxu0 0.0
    %136 = vmatpush1.msra.mxu0 0.0
    %137 = vmatprep.subr.mxu0 0.0
    %138 = vmatpush1.msra.mxu0 0.0
    %139 = vmatprep.subr.mxu0 0.0
    %140 = vmatpush1.msra.mxu0 0.0
    %141 = vmatprep.subr.mxu0 0.0
    %142 = vmatpush1.msra.mxu0 0.0
    %143 = vmatprep.subr.mxu0 0.0
    %144 = vmatpush1.msra.mxu0 0.0
    %145 = vmatprep.subr.mxu0 0.0
    %146 = vmatpush1.msra.mxu0 0.0
    %147 = vmatprep.subr.mxu0 0.0
    %148 = vmatpush1.msra.mxu0 0.0
    %149 = vmatprep.subr.mxu0 0.0
    %150 = vmatpush1.msra.mxu0 0.0
    %151 = vmatprep.subr.mxu0 0.0
    %152 = vmatpush1.msra.mxu0 0.0
    %153 = vmatprep.subr.mxu0 0.0
    %154 = vmatpush1.msra.mxu0 0.0
    %155 = vmatprep.subr.mxu0 0.0
    %156 = vmatpush1.msra.mxu0 0.0
    %157 = vmatprep.subr.mxu0 0.0
    %158 = vmatpush1.msra.mxu0 0.0
    %159 = vmatprep.subr.mxu0 0.0
    %160 = vmatpush1.msra.mxu0 0.0
    %161 = vmatprep.subr.mxu0 0.0
    %162 = vmatpush1.msra.mxu0 0.0
    %163 = vmatprep.subr.mxu0 0.0
    %164 = vmatpush1.msra.mxu0 0.0
    %165 = vmatprep.subr.mxu0 0.0
    %166 = vmatpush1.msra.mxu0 0.0
    %167 = vmatprep.subr.mxu0 0.0
    %168 = vmatpush1.msra.mxu0 0.0
    %169 = vmatprep.subr.mxu0 0.0
    %170 = vmatpush1.msra.mxu0 0.0
    %171 = vmatprep.subr.mxu0 0.0
    %172 = vmatpush1.msra.mxu0 0.0
    %173 = vmatprep.subr.mxu0 0.0
    %174 = vmatpush1.msra.mxu0 0.0
    %175 = vmatprep.subr.mxu0 0.0
    %176 = vmatpush1.msra.mxu0 0.0
    %177 = vmatprep.mubr.f32.mxu0 0.0
    %178 = vmatmul.mubr.f32.gmra.mrb[0].mxu0 %v107
    %v179 = vpop.f32.mrb[0].mxu0
    %v180 = vadd.f32 0.0, %v179
    %v181 = vpop.f32.mrb[0].mxu0
    %182 = vdwg.mxu0
    %v183 = vld [vmem:[%s3] sm:$0x1]
    %v184 = vmul.f32 %v99, %v180
    %v186 = vlaneseq
    %v187 = vshrl.u32 %v186, 7
    %v188 = vsub.s32 0, %v187
    %v189 = vrot.slane %v183, %v188
    %v191 = vmul.f32 %v189, %v184
    %v192 = vld [vmem:[%s1] sm:$0xff]
    %v193 = vadd.f32 %v192, %v191
    %194 = vst [vmem:[#allocation4] sm:$0xff] %v193
    // Predicated region
    $region14: #{tpu_custom_call.1} parent=1 // pred_check
      _
    $region15: #{tpu_custom_call.1} parent=1 // pred_check_branch
      %196 = sbr.rel (0) target = $region17
    $region16: #{tpu_custom_call.1} parent=1 // pred_region
      %s198 = ssub.s32 128, 128
      %199 = vsyncadd [#allocation5], %s198
      %s201 = sshll.u32 [#allocation4], 4
      %s202 = int_to_ptr.vmem [resolvable:$true] %s201
      %204 = dma.vmem_to_hbm [thread:$0]  %s202, 128, %s4, [#allocation5]
    $region17: #{tpu_custom_call.1} parent=1 // pred_fallthru
      _
    // Predicated region
    $region18: #{tpu_custom_call.1} parent=1 // pred_check
      _
    $region19: #{tpu_custom_call.1} parent=1 // pred_check_branch
      %206 = sbr.rel (0) target = $region21
    $region20: #{tpu_custom_call.1} parent=1 // pred_region
      %207 = dma.done [#allocation5], 128
    $region21: #{tpu_custom_call.1} parent=1 // pred_fallthru
      _
    %208 = vsyncpa [#allocation5], 1

</llo_original>
